<compile_context>
chip_gen: v7x
topology: tpu7x:2x2x1
jax: 0.10.0
libtpu: 0.0.40
codegen_flags: <defaults>
</compile_context>

<pallas_src>
import jax
import jax.numpy as jnp
import numpy as np
from jax.experimental import pallas as pl
from jax.experimental.pallas import tpu as pltpu


def _double_conv_kernel(x_ref, t1_ref, b1_ref, t2_ref, b2_ref, out_ref,
                        xpad_ref, midpad_ref):
    """Fully fused DoubleConv for one batch element.

    x_ref     : (1, H, W*Cin)        image rows, lane axis = W*Cin
    t1_ref    : (3, W*Cin, W*Cmid)   banded conv1 weights, one slab per dy tap
    b1_ref    : (1, W*Cmid)          conv1 bias tiled across W
    t2_ref    : (3, W*Cmid, W*Cout)  banded conv2 weights
    b2_ref    : (1, W*Cout)          conv2 bias tiled across W
    out_ref   : (1, H, W*Cout)       lane-dense output rows
    xpad_ref  : VMEM (H+2, W*Cin)    input with zero halo rows (padding=1 in H)
    midpad_ref: VMEM (H+2, W*Cmid)   conv1+ReLU result with zero halo rows
    """
    H = out_ref.shape[1]

    # Halo rows never get overwritten by the interior copies below, and VMEM
    # scratch persists across grid steps -> zero them only once.
    @pl.when(pl.program_id(0) == 0)
    def _init_halos():
        xpad_ref[0:1, :] = jnp.zeros((1, xpad_ref.shape[1]), jnp.float32)
        xpad_ref[H + 1:H + 2, :] = jnp.zeros((1, xpad_ref.shape[1]), jnp.float32)
        midpad_ref[0:1, :] = jnp.zeros((1, midpad_ref.shape[1]), jnp.float32)
        midpad_ref[H + 1:H + 2, :] = jnp.zeros((1, midpad_ref.shape[1]), jnp.float32)

    # ---- stage 1: conv1 + ReLU (intermediate stays in VMEM, never hits HBM) ----
    xpad_ref[1:H + 1, :] = x_ref[0].astype(jnp.float32)

    acc1 = jnp.zeros((H, midpad_ref.shape[1]), jnp.float32)
    for dy in range(3):                             # sublane-only slice per row tap
        acc1 += jnp.dot(xpad_ref[dy:dy + H, :], t1_ref[dy],
                        preferred_element_type=jnp.float32)

    midpad_ref[1:H + 1, :] = jnp.maximum(acc1 + b1_ref[...], 0.0)

    # ---- stage 2: conv2 + ReLU ----
    acc2 = jnp.zeros((H, out_ref.shape[2]), jnp.float32)
    for dy in range(3):
        acc2 += jnp.dot(midpad_ref[dy:dy + H, :], t2_ref[dy],
                        preferred_element_type=jnp.float32)

    out_ref[0] = jnp.maximum(acc2 + b2_ref[...], 0.0).astype(out_ref.dtype)


def _band_weights(w_hwio, width):
    """(3, 3, Cin, Cout) HWIO weights -> (3, W*Cin, W*Cout) banded matrices.

    T[dy, wx*Cin+ci, wo*Cout+co] = w[dy, wx-wo+1, ci, co] if |wx-wo| <= 1 else 0,
    i.e. the dx taps AND the width zero-padding of a stride-1 'same' conv are
    folded into one lane-dense matmul operand per dy row tap.
    """
    _, _, cin, cout = w_hwio.shape
    wx = np.arange(width)[None, :, None]             # input column index
    wo = np.arange(width)[None, None, :]             # output column index
    dx = np.arange(3)[:, None, None]
    mask = jnp.asarray((wx == wo + dx - 1).astype(np.float32))   # (3, W, W) static
    # (dx, wx, wo) x (dy, dx, ci, co) -> (dy, wx, ci, wo, co)
    t = jnp.einsum('xab,yxio->yaibo', mask, w_hwio.astype(jnp.float32))
    return t.reshape(3, width * cin, width * cout)


def double_conv_nhwc(x_nhwc, params):
    """Fused DoubleConv forward, native NHWC. x: (N,H,W,Cin) -> (N,H,W,Cout)."""
    w1, b1, w2, b2 = params
    N, H, W, Cin = x_nhwc.shape
    Cmid = w1.shape[-1]
    Cout = w2.shape[-1]

    x_rows = x_nhwc.reshape(N, H, W * Cin)           # contiguous -> free reshape
    t1 = _band_weights(w1, W)                        # (3, W*Cin,  W*Cmid)
    t2 = _band_weights(w2, W)                        # (3, W*Cmid, W*Cout)
    b1_row = jnp.tile(b1, W).reshape(1, W * Cmid)
    b2_row = jnp.tile(b2, W).reshape(1, W * Cout)

    # Banded-matmul flop count (what the MXU actually executes).
    flops = N * H * (3 * 2 * (W * Cin) * (W * Cmid) + 3 * 2 * (W * Cmid) * (W * Cout))
    bytes_accessed = 4 * (x_rows.size + t1.size + t2.size + b1_row.size
                          + b2_row.size + N * H * W * Cout)

    # TODO(synk): for large images/channels add an H-row grid axis with a 2-row
    # halo and size the row tile for v7x's 64 MiB VMEM; whole-image blocks are
    # fine at these UNet-block test sizes.
    # TODO(synk): optionally cast matmul operands to bf16 (f32 accumulation)
    # once model numerics allow it.
    out_rows = pl.pallas_call(
        _double_conv_kernel,
        out_shape=jax.ShapeDtypeStruct((N, H, W * Cout), x_nhwc.dtype),
        grid_spec=pltpu.PrefetchScalarGridSpec(
            num_scalar_prefetch=0,
            grid=(N,),
            in_specs=[
                pl.BlockSpec((1, H, W * Cin), lambda n: (n, 0, 0)),
                pl.BlockSpec((3, W * Cin, W * Cmid), lambda n: (0, 0, 0)),
                pl.BlockSpec((1, W * Cmid), lambda n: (0, 0)),
                pl.BlockSpec((3, W * Cmid, W * Cout), lambda n: (0, 0, 0)),
                pl.BlockSpec((1, W * Cout), lambda n: (0, 0)),
            ],
            out_specs=pl.BlockSpec((1, H, W * Cout), lambda n: (n, 0, 0)),
            scratch_shapes=[
                pltpu.VMEM((H + 2, W * Cin), jnp.float32),
                pltpu.VMEM((H + 2, W * Cmid), jnp.float32),
            ],
        ),
        compiler_params=pltpu.CompilerParams(
            dimension_semantics=("parallel",),
            vmem_limit_bytes=32 * 1024 * 1024,
        ),
        cost_estimate=pl.CostEstimate(flops=flops, transcendentals=0,
                                      bytes_accessed=bytes_accessed),
    )(x_rows, t1, b1_row, t2, b2_row)

    return out_rows.reshape(N, H, W, Cout)


def double_conv(x_nchw, params):
    """PyTorch-layout entry point: (N, Cin, H, W) -> (N, Cout, H, W).

    The NCHW<->NHWC transposes exist only to match the PyTorch module's API;
    an NHWC end-to-end model should call double_conv_nhwc directly.
    """
    x = jnp.transpose(x_nchw, (0, 2, 3, 1))
    y = double_conv_nhwc(x, params)
    return jnp.transpose(y, (0, 3, 1, 2))


def init_params(key, in_channels, out_channels):
    """Deterministic init mimicking PyTorch Conv2d default (uniform(-k, k), k=1/sqrt(fan_in))."""
    k1, k2, k3, k4 = jax.random.split(key, 4)
    lim1 = 1.0 / np.sqrt(in_channels * 9)
    lim2 = 1.0 / np.sqrt(out_channels * 9)
    # weights stored HWIO: (3, 3, Cin, Cout)
    w1 = jax.random.uniform(k1, (3, 3, in_channels, out_channels),
                            jnp.float32, -lim1, lim1)
    b1 = jax.random.uniform(k2, (out_channels,), jnp.float32, -lim1, lim1)
    w2 = jax.random.uniform(k3, (3, 3, out_channels, out_channels),
                            jnp.float32, -lim2, lim2)
    b2 = jax.random.uniform(k4, (out_channels,), jnp.float32, -lim2, lim2)
    return w1, b1, w2, b2


def _reference_double_conv(x_nchw, params):
    """Pure-JAX reference (XLA conv) for correctness checking."""
    w1, b1, w2, b2 = params

    def conv(x, w, b):
        y = jax.lax.conv_general_dilated(
            x, w, window_strides=(1, 1), padding="SAME",
            dimension_numbers=("NCHW", "HWIO", "NCHW"))
        return jnp.maximum(y + b[None, :, None, None], 0.0)

    return conv(conv(x_nchw, w1, b1), w2, b2)


if __name__ == "__main__":
    key = jax.random.PRNGKey(0)
    kx, kp = jax.random.split(key)

    N, Cin, Cout, H, W = 2, 4, 8, 16, 16
    x = jax.random.normal(kx, (N, Cin, H, W), jnp.float32)
    params = init_params(kp, Cin, Cout)

    out = double_conv(x, params)
    out = jax.block_until_ready(out)

    ref = _reference_double_conv(x, params)
    assert out.shape == (N, Cout, H, W)
    assert np.allclose(np.asarray(out), np.asarray(ref), atol=1e-4, rtol=1e-4)

    print("KERNEL_OK")
</pallas_src>

<mosaic_0001>
module attributes {stable_mosaic.version = 11 : i64} {
  func.func @_double_conv_kernel(%arg0: i32, %arg1: memref<1x16x64xf32, #tpu.memory_space<vmem>>, %arg2: memref<3x64x128xf32, #tpu.memory_space<vmem>>, %arg3: memref<1x128xf32, #tpu.memory_space<vmem>>, %arg4: memref<3x128x128xf32, #tpu.memory_space<vmem>>, %arg5: memref<1x128xf32, #tpu.memory_space<vmem>>, %arg6: memref<1x16x128xf32, #tpu.memory_space<vmem>>, %arg7: memref<18x64xf32, #tpu.memory_space<vmem>>, %arg8: memref<18x128xf32, #tpu.memory_space<vmem>>) attributes {dimension_semantics = [#tpu.dimension_semantics<parallel>], iteration_bounds = array<i64: 2>, scalar_prefetch = 0 : i64, scratch_operands = 2 : i64, tpu.core_type = #tpu.core_type<tc>, window_params = [{transform_indices = @transform_0, window_bounds = array<i64: 1, 16, 64>}, {pipeline_mode = #tpu.pipeline_mode<synchronous>, transform_indices = @transform_1, window_bounds = array<i64: 3, 64, 128>}, {pipeline_mode = #tpu.pipeline_mode<synchronous>, transform_indices = @transform_2, window_bounds = array<i64: 1, 128>}, {pipeline_mode = #tpu.pipeline_mode<synchronous>, transform_indices = @transform_3, window_bounds = array<i64: 3, 128, 128>}, {pipeline_mode = #tpu.pipeline_mode<synchronous>, transform_indices = @transform_4, window_bounds = array<i64: 1, 128>}, {transform_indices = @transform_5, window_bounds = array<i64: 1, 16, 128>}]} {
    %c0_i32 = arith.constant 0 : i32
    %0 = arith.cmpi eq, %arg0, %c0_i32 : i32
    %1 = arith.extui %0 : i1 to i32
    %c0_i32_0 = arith.constant 0 : i32
    %2 = arith.cmpi ne, %1, %c0_i32_0 : i32
    scf.if %2 {
      %cst_51 = arith.constant 0.000000e+00 : f32
      %52 = vector.broadcast %cst_51 : f32 to vector<1x64xf32>
      %c0_52 = arith.constant 0 : index
      %c0_53 = arith.constant 0 : index
      %53 = vector.load %arg7[%c0_52, %c0_53] : memref<18x64xf32, #tpu.memory_space<vmem>>, vector<1x64xf32>
      tpu.vector_store %arg7[%c0_52, %c0_53], %52 {strides = array<i32>} : memref<18x64xf32, #tpu.memory_space<vmem>>, vector<1x64xf32>,
      %cst_54 = arith.constant 0.000000e+00 : f32
      %54 = vector.broadcast %cst_54 : f32 to vector<1x64xf32>
      %c17 = arith.constant 17 : index
      %c0_55 = arith.constant 0 : index
      %55 = vector.load %arg7[%c17, %c0_55] : memref<18x64xf32, #tpu.memory_space<vmem>>, vector<1x64xf32>
      tpu.vector_store %arg7[%c17, %c0_55], %54 {strides = array<i32>} : memref<18x64xf32, #tpu.memory_space<vmem>>, vector<1x64xf32>,
      %cst_56 = arith.constant 0.000000e+00 : f32
      %56 = vector.broadcast %cst_56 : f32 to vector<1x128xf32>
      %c0_57 = arith.constant 0 : index
      %c0_58 = arith.constant 0 : index
      %57 = vector.load %arg8[%c0_57, %c0_58] : memref<18x128xf32, #tpu.memory_space<vmem>>, vector<1x128xf32>
      tpu.vector_store %arg8[%c0_57, %c0_58], %56 {strides = array<i32>} : memref<18x128xf32, #tpu.memory_space<vmem>>, vector<1x128xf32>,
      %cst_59 = arith.constant 0.000000e+00 : f32
      %58 = vector.broadcast %cst_59 : f32 to vector<1x128xf32>
      %c17_60 = arith.constant 17 : index
      %c0_61 = arith.constant 0 : index
      %59 = vector.load %arg8[%c17_60, %c0_61] : memref<18x128xf32, #tpu.memory_space<vmem>>, vector<1x128xf32>
      tpu.vector_store %arg8[%c17_60, %c0_61], %58 {strides = array<i32>} : memref<18x128xf32, #tpu.memory_space<vmem>>, vector<1x128xf32>,
    } else {
    }
    %c0 = arith.constant 0 : index
    %c0_1 = arith.constant 0 : index
    %c0_2 = arith.constant 0 : index
    %3 = vector.load %arg1[%c0, %c0_1, %c0_2] : memref<1x16x64xf32, #tpu.memory_space<vmem>>, vector<1x16x64xf32>
    %4 = vector.shape_cast %3 : vector<1x16x64xf32> to vector<16x64xf32>
    %c1 = arith.constant 1 : index
    %c0_3 = arith.constant 0 : index
    %5 = vector.load %arg7[%c1, %c0_3] : memref<18x64xf32, #tpu.memory_space<vmem>>, vector<16x64xf32>
    tpu.vector_store %arg7[%c1, %c0_3], %4 {strides = array<i32>} : memref<18x64xf32, #tpu.memory_space<vmem>>, vector<16x64xf32>,
    %cst = arith.constant 0.000000e+00 : f32
    %6 = vector.broadcast %cst : f32 to vector<16x128xf32>
    %c0_4 = arith.constant 0 : index
    %c0_5 = arith.constant 0 : index
    %7 = vector.load %arg7[%c0_4, %c0_5] : memref<18x64xf32, #tpu.memory_space<vmem>>, vector<16x64xf32>
    %c0_6 = arith.constant 0 : index
    %c0_7 = arith.constant 0 : index
    %c0_8 = arith.constant 0 : index
    %8 = vector.load %arg2[%c0_6, %c0_7, %c0_8] : memref<3x64x128xf32, #tpu.memory_space<vmem>>, vector<1x64x128xf32>
    %9 = vector.shape_cast %8 : vector<1x64x128xf32> to vector<64x128xf32>
    %cst_9 = arith.constant dense<0.000000e+00> : vector<16x128xf32>
    %10 = tpu.matmul %7, %9, %cst_9 {dimension_numbers = #tpu.dot_dimension_numbers<[1], [0], [0], [1], [0, 0, 1, 1], [], []>} : vector<16x64xf32>, vector<64x128xf32>, vector<16x128xf32> -> vector<16x128xf32>
    %11 = arith.addf %6, %10 : vector<16x128xf32>
    %c1_10 = arith.constant 1 : index
    %c0_11 = arith.constant 0 : index
    %12 = vector.load %arg7[%c1_10, %c0_11] : memref<18x64xf32, #tpu.memory_space<vmem>>, vector<16x64xf32>
    %c1_12 = arith.constant 1 : index
    %c0_13 = arith.constant 0 : index
    %c0_14 = arith.constant 0 : index
    %13 = vector.load %arg2[%c1_12, %c0_13, %c0_14] : memref<3x64x128xf32, #tpu.memory_space<vmem>>, vector<1x64x128xf32>
    %14 = vector.shape_cast %13 : vector<1x64x128xf32> to vector<64x128xf32>
    %cst_15 = arith.constant dense<0.000000e+00> : vector<16x128xf32>
    %15 = tpu.matmul %12, %14, %cst_15 {dimension_numbers = #tpu.dot_dimension_numbers<[1], [0], [0], [1], [0, 0, 1, 1], [], []>} : vector<16x64xf32>, vector<64x128xf32>, vector<16x128xf32> -> vector<16x128xf32>
    %16 = arith.addf %11, %15 : vector<16x128xf32>
    %c2 = arith.constant 2 : index
    %c0_16 = arith.constant 0 : index
    %17 = vector.load %arg7[%c2, %c0_16] : memref<18x64xf32, #tpu.memory_space<vmem>>, vector<16x64xf32>
    %c2_17 = arith.constant 2 : index
    %c0_18 = arith.constant 0 : index
    %c0_19 = arith.constant 0 : index
    %18 = vector.load %arg2[%c2_17, %c0_18, %c0_19] : memref<3x64x128xf32, #tpu.memory_space<vmem>>, vector<1x64x128xf32>
    %19 = vector.shape_cast %18 : vector<1x64x128xf32> to vector<64x128xf32>
    %cst_20 = arith.constant dense<0.000000e+00> : vector<16x128xf32>
    %20 = tpu.matmul %17, %19, %cst_20 {dimension_numbers = #tpu.dot_dimension_numbers<[1], [0], [0], [1], [0, 0, 1, 1], [], []>} : vector<16x64xf32>, vector<64x128xf32>, vector<16x128xf32> -> vector<16x128xf32>
    %21 = arith.addf %16, %20 : vector<16x128xf32>
    %c0_21 = arith.constant 0 : index
    %c0_22 = arith.constant 0 : index
    %22 = vector.load %arg3[%c0_21, %c0_22] : memref<1x128xf32, #tpu.memory_space<vmem>>, vector<1x128xf32>
    %23 = vector.broadcast %22 : vector<1x128xf32> to vector<16x128xf32>
    %24 = arith.addf %21, %23 : vector<16x128xf32>
    %cst_23 = arith.constant 0.000000e+00 : f32
    %25 = vector.broadcast %cst_23 : f32 to vector<16x128xf32>
    %26 = arith.maximumf %24, %25 : vector<16x128xf32>
    %c1_24 = arith.constant 1 : index
    %c0_25 = arith.constant 0 : index
    %27 = vector.load %arg8[%c1_24, %c0_25] : memref<18x128xf32, #tpu.memory_space<vmem>>, vector<16x128xf32>
    tpu.vector_store %arg8[%c1_24, %c0_25], %26 {strides = array<i32>} : memref<18x128xf32, #tpu.memory_space<vmem>>, vector<16x128xf32>,
    %cst_26 = arith.constant 0.000000e+00 : f32
    %28 = vector.broadcast %cst_26 : f32 to vector<16x128xf32>
    %c0_27 = arith.constant 0 : index
    %c0_28 = arith.constant 0 : index
    %29 = vector.load %arg8[%c0_27, %c0_28] : memref<18x128xf32, #tpu.memory_space<vmem>>, vector<16x128xf32>
    %c0_29 = arith.constant 0 : index
    %c0_30 = arith.constant 0 : index
    %c0_31 = arith.constant 0 : index
    %30 = vector.load %arg4[%c0_29, %c0_30, %c0_31] : memref<3x128x128xf32, #tpu.memory_space<vmem>>, vector<1x128x128xf32>
    %31 = vector.shape_cast %30 : vector<1x128x128xf32> to vector<128x128xf32>
    %cst_32 = arith.constant dense<0.000000e+00> : vector<16x128xf32>
    %32 = tpu.matmul %29, %31, %cst_32 {dimension_numbers = #tpu.dot_dimension_numbers<[1], [0], [0], [1], [0, 0, 1, 1], [], []>} : vector<16x128xf32>, vector<128x128xf32>, vector<16x128xf32> -> vector<16x128xf32>
    %33 = arith.addf %28, %32 : vector<16x128xf32>
    %c1_33 = arith.constant 1 : index
    %c0_34 = arith.constant 0 : index
    %34 = vector.load %arg8[%c1_33, %c0_34] : memref<18x128xf32, #tpu.memory_space<vmem>>, vector<16x128xf32>
    %c1_35 = arith.constant 1 : index
    %c0_36 = arith.constant 0 : index
    %c0_37 = arith.constant 0 : index
    %35 = vector.load %arg4[%c1_35, %c0_36, %c0_37] : memref<3x128x128xf32, #tpu.memory_space<vmem>>, vector<1x128x128xf32>
    %36 = vector.shape_cast %35 : vector<1x128x128xf32> to vector<128x128xf32>
    %cst_38 = arith.constant dense<0.000000e+00> : vector<16x128xf32>
    %37 = tpu.matmul %34, %36, %cst_38 {dimension_numbers = #tpu.dot_dimension_numbers<[1], [0], [0], [1], [0, 0, 1, 1], [], []>} : vector<16x128xf32>, vector<128x128xf32>, vector<16x128xf32> -> vector<16x128xf32>
    %38 = arith.addf %33, %37 : vector<16x128xf32>
    %c2_39 = arith.constant 2 : index
    %c0_40 = arith.constant 0 : index
    %39 = vector.load %arg8[%c2_39, %c0_40] : memref<18x128xf32, #tpu.memory_space<vmem>>, vector<16x128xf32>
    %c2_41 = arith.constant 2 : index
    %c0_42 = arith.constant 0 : index
    %c0_43 = arith.constant 0 : index
    %40 = vector.load %arg4[%c2_41, %c0_42, %c0_43] : memref<3x128x128xf32, #tpu.memory_space<vmem>>, vector<1x128x128xf32>
    %41 = vector.shape_cast %40 : vector<1x128x128xf32> to vector<128x128xf32>
    %cst_44 = arith.constant dense<0.000000e+00> : vector<16x128xf32>
    %42 = tpu.matmul %39, %41, %cst_44 {dimension_numbers = #tpu.dot_dimension_numbers<[1], [0], [0], [1], [0, 0, 1, 1], [], []>} : vector<16x128xf32>, vector<128x128xf32>, vector<16x128xf32> -> vector<16x128xf32>
    %43 = arith.addf %38, %42 : vector<16x128xf32>
    %c0_45 = arith.constant 0 : index
    %c0_46 = arith.constant 0 : index
    %44 = vector.load %arg5[%c0_45, %c0_46] : memref<1x128xf32, #tpu.memory_space<vmem>>, vector<1x128xf32>
    %45 = vector.broadcast %44 : vector<1x128xf32> to vector<16x128xf32>
    %46 = arith.addf %43, %45 : vector<16x128xf32>
    %cst_47 = arith.constant 0.000000e+00 : f32
    %47 = vector.broadcast %cst_47 : f32 to vector<16x128xf32>
    %48 = arith.maximumf %46, %47 : vector<16x128xf32>
    %c0_48 = arith.constant 0 : index
    %c0_49 = arith.constant 0 : index
    %c0_50 = arith.constant 0 : index
    %49 = vector.load %arg6[%c0_48, %c0_49, %c0_50] : memref<1x16x128xf32, #tpu.memory_space<vmem>>, vector<1x16x128xf32>
    %50 = vector.shape_cast %49 : vector<1x16x128xf32> to vector<16x128xf32>
    %51 = vector.shape_cast %48 : vector<16x128xf32> to vector<1x16x128xf32>
    tpu.vector_store %arg6[%c0_48, %c0_49, %c0_50], %51 {strides = array<i32>} : memref<1x16x128xf32, #tpu.memory_space<vmem>>, vector<1x16x128xf32>,
    return
  }
  func.func @transform_0(%arg0: i32) -> (i32, i32, i32) {
    %c0_i32 = arith.constant 0 : i32
    %c0_i32_0 = arith.constant 0 : i32
    %c0_i32_1 = arith.constant 0 : i32
    return %arg0, %c0_i32, %c0_i32_0 : i32, i32, i32
  }
  func.func @transform_1(%arg0: i32) -> (i32, i32, i32) {
    %c0_i32 = arith.constant 0 : i32
    %c0_i32_0 = arith.constant 0 : i32
    %c0_i32_1 = arith.constant 0 : i32
    %c0_i32_2 = arith.constant 0 : i32
    return %c0_i32, %c0_i32_0, %c0_i32_1 : i32, i32, i32
  }
  func.func @transform_2(%arg0: i32) -> (i32, i32) {
    %c0_i32 = arith.constant 0 : i32
    %c0_i32_0 = arith.constant 0 : i32
    %c0_i32_1 = arith.constant 0 : i32
    return %c0_i32, %c0_i32_0 : i32, i32
  }
  func.func @transform_3(%arg0: i32) -> (i32, i32, i32) {
    %c0_i32 = arith.constant 0 : i32
    %c0_i32_0 = arith.constant 0 : i32
    %c0_i32_1 = arith.constant 0 : i32
    %c0_i32_2 = arith.constant 0 : i32
    return %c0_i32, %c0_i32_0, %c0_i32_1 : i32, i32, i32
  }
  func.func @transform_4(%arg0: i32) -> (i32, i32) {
    %c0_i32 = arith.constant 0 : i32
    %c0_i32_0 = arith.constant 0 : i32
    %c0_i32_1 = arith.constant 0 : i32
    return %c0_i32, %c0_i32_0 : i32, i32
  }
  func.func @transform_5(%arg0: i32) -> (i32, i32, i32) {
    %c0_i32 = arith.constant 0 : i32
    %c0_i32_0 = arith.constant 0 : i32
    %c0_i32_1 = arith.constant 0 : i32
    return %arg0, %c0_i32, %c0_i32_0 : i32, i32, i32
  }
}

</mosaic_0001>

<llo_original>
// kernel: tpu_custom_call.1
$region0: #{tpu_custom_call.1}
  #allocation0 [shape = 'u32[]', space=smem, size = 0x4, offset = 0x4, fixed_abs, tag = 'smem constant byte address 0x4 - core index']
  #allocation1 [shape = 'u32[144,128]{1,0:T(1,128)}', space=vmem, size = 0x12000, scoped, tag = 'internal scratch']
  #allocation2 [shape = 'f32[18,64]{1,0:T(8,128)}', space=vmem, size = 0x3000, scoped, tag = 'scratch operand']
  #allocation3 [shape = 'f32[18,128]{1,0:T(8,128)}', space=vmem, size = 0x3000, scoped, tag = 'scratch operand']
  %s0 = inlined_call_operand.hbm [shape: f32[2,16,64], index: 0, kind: input, shape index: {}]
  %s1 = inlined_call_operand.hbm [shape: f32[3,64,128], index: 1, kind: input, shape index: {}]
  %s2 = inlined_call_operand.vmem [shape: f32[1,128], index: 2, kind: input, shape index: {}]
  %s3 = inlined_call_operand.hbm [shape: f32[3,128,128], index: 3, kind: input, shape index: {}]
  %s4 = inlined_call_operand.vmem [shape: f32[1,128], index: 4, kind: input, shape index: {}]
  %s5 = inlined_call_operand.hbm [shape: f32[2,16,128], index: 5, kind: output, shape index: {}]
  %s6 = sld [smem:[#allocation0]]
  $region69: #{tpu_custom_call.1} parent=0
    _
  %s8 = ssub.s32 1, %s6
  %s9 = scalar_select 0, %s8, %s6
  $region1: #{tpu_custom_call.1} parent=0
    #allocation4 [shape = 'u8[16384]{0}', space=vmem, size = 0x4000, scoped, tag = 'input window, operand 0']
    #allocation5 [shape = 's32[2]{0}', space=sflag, size = 0x8, scoped, tag = 'scoped memory for tpu_custom_call.1']
    #allocation6 [shape = 's32[2]{0}', space=sflag, size = 0x8, scoped, tag = 'scoped memory for tpu_custom_call.1']
    #allocation7 [shape = 'u8[98304]{0}', space=vmem, size = 0x18000, scoped, tag = 'input window, operand 1, single buffered']
    #allocation8 [shape = 's32[1]{0}', space=sflag, size = 0x4, scoped, tag = 'scoped memory for tpu_custom_call.1']
    #allocation9 [shape = 'u8[196608]{0}', space=vmem, size = 0x30000, scoped, tag = 'input window, operand 3, single buffered']
    #allocation10 [shape = 'u8[16384]{0}', space=vmem, size = 0x4000, scoped, tag = 'output window, operand 0']
    %10 = vsyncpa [#allocation5], 0
    %s11 = scalar_lea.sflag [#allocation5], 1
    %12 = vsyncpa %s11, 0
    %13 = vsyncpa [#allocation8], 0
    %14 = vsyncpa [#allocation6], 0
    %s15 = scalar_lea.sflag [#allocation6], 1
    %16 = vsyncpa %s15, 0
    loop: start=0, step=1, limit=4
    $region2: #{tpu_custom_call.1} parent=1 // loop_pre_header
      _
    $region3: #{tpu_custom_call.1} parent=1 // loop_header
      %s18 = sphi 0, %s22
      %p19 = scmp.ge.s32.totalorder %s18, 4
      %s28 = sphi 0, %s30
      %s31 = sphi 0, %s28
      %s32 = sphi 0, %s31
      %s48 = sphi 0, %s32
      %s52 = sphi 0, %s52
      %s54 = sphi 0, %s52
      %s55 = sphi 0, %s54
      %s69 = sphi 0, %s55
      %s73 = sphi 0, %s73
      %s75 = sphi 0, %s73
      %s76 = sphi 0, %s75
      %s90 = sphi 0, %s76
      %s94 = sphi 0, %s94
      %s96 = sphi 0, %s94
      %s97 = sphi 0, %s96
      %s111 = sphi 0, %s97
      %s115 = sphi 0, %s115
      %s117 = sphi 0, %s115
      %s118 = sphi 0, %s117
      %s132 = sphi 0, %s118
      %s138 = sphi 0, %s140
      %s141 = sphi 0, %s138
      %s142 = sphi 0, %s141
      %s158 = sphi 0, %s142
    $region4: #{tpu_custom_call.1} parent=1 // loop_header_branch
      %21 = sbr.rel (%p19) target = $region8
    $region5: #{tpu_custom_call.1} parent=1 // loop_body
      %s23 = ssub.s32 %s18, 1
      %s24 = ssub.s32 %s18, 2
      %s25 = sadd.s32 %s18, 1
      %s26 = ssub.s32 %s18, %s25
      %p27 = scmp.eq.s32.totalorder %s26, 0
      %s29 = sadd.s32 %s28, 1
      %s30 = scalar_select %p27, %s28, %s29
      %p33 = pneg %p27
      %p34 = scmp.eq.s32.totalorder %s18, 1
      %p35 = por %p33, %p34
      %p36 = scmp.ne.s32.totalorder %s28, %s31
      %p37 = scmp.eq.s32.totalorder %s18, 0
      %p38 = por %p36, %p37
      %p39 = scmp.ne.s32.totalorder %s28, %s31
      %p40 = scmp.eq.s32.totalorder %s23, 1
      %p41 = por %p39, %p40
      %p42 = scmp.ne.s32.totalorder %s31, %s32
      %p43 = scmp.eq.s32.totalorder %s23, 0
      %p44 = por %p42, %p43
      %p45 = scmp.ne.s32.totalorder %s31, %s32
      %p46 = scmp.eq.s32.totalorder %s24, 1
      %p47 = por %p45, %p46
      %p49 = scmp.ne.s32.totalorder %s32, %s48
      %p50 = scmp.eq.s32.totalorder %s24, 0
      %p51 = por %p49, %p50
      %s53 = sadd.s32 %s52, 1
      %p56 = scmp.eq.s32.totalorder %s18, 1
      %p57 = scmp.ne.s32.totalorder %s52, %s54
      %p58 = scmp.eq.s32.totalorder %s18, 0
      %p59 = por %p57, %p58
      %p60 = scmp.ne.s32.totalorder %s52, %s54
      %p61 = scmp.eq.s32.totalorder %s23, 1
      %p62 = por %p60, %p61
      %p63 = scmp.ne.s32.totalorder %s54, %s55
      %p64 = scmp.eq.s32.totalorder %s23, 0
      %p65 = por %p63, %p64
      %p66 = scmp.ne.s32.totalorder %s54, %s55
      %p67 = scmp.eq.s32.totalorder %s24, 1
      %p68 = por %p66, %p67
      %p70 = scmp.ne.s32.totalorder %s55, %s69
      %p71 = scmp.eq.s32.totalorder %s24, 0
      %p72 = por %p70, %p71
      %s74 = sadd.s32 %s73, 1
      %p77 = scmp.eq.s32.totalorder %s18, 1
      %p78 = scmp.ne.s32.totalorder %s73, %s75
      %p79 = scmp.eq.s32.totalorder %s18, 0
      %p80 = por %p78, %p79
      %p81 = scmp.ne.s32.totalorder %s73, %s75
      %p82 = scmp.eq.s32.totalorder %s23, 1
      %p83 = por %p81, %p82
      %p84 = scmp.ne.s32.totalorder %s75, %s76
      %p85 = scmp.eq.s32.totalorder %s23, 0
      %p86 = por %p84, %p85
      %p87 = scmp.ne.s32.totalorder %s75, %s76
      %p88 = scmp.eq.s32.totalorder %s24, 1
      %p89 = por %p87, %p88
      %p91 = scmp.ne.s32.totalorder %s76, %s90
      %p92 = scmp.eq.s32.totalorder %s24, 0
      %p93 = por %p91, %p92
      %s95 = sadd.s32 %s94, 1
      %p98 = scmp.eq.s32.totalorder %s18, 1
      %p99 = scmp.ne.s32.totalorder %s94, %s96
      %p100 = scmp.eq.s32.totalorder %s18, 0
      %p101 = por %p99, %p100
      %p102 = scmp.ne.s32.totalorder %s94, %s96
      %p103 = scmp.eq.s32.totalorder %s23, 1
      %p104 = por %p102, %p103
      %p105 = scmp.ne.s32.totalorder %s96, %s97
      %p106 = scmp.eq.s32.totalorder %s23, 0
      %p107 = por %p105, %p106
      %p108 = scmp.ne.s32.totalorder %s96, %s97
      %p109 = scmp.eq.s32.totalorder %s24, 1
      %p110 = por %p108, %p109
      %p112 = scmp.ne.s32.totalorder %s97, %s111
      %p113 = scmp.eq.s32.totalorder %s24, 0
      %p114 = por %p112, %p113
      %s116 = sadd.s32 %s115, 1
      %p119 = scmp.eq.s32.totalorder %s18, 1
      %p120 = scmp.ne.s32.totalorder %s115, %s117
      %p121 = scmp.eq.s32.totalorder %s18, 0
      %p122 = por %p120, %p121
      %p123 = scmp.ne.s32.totalorder %s115, %s117
      %p124 = scmp.eq.s32.totalorder %s23, 1
      %p125 = por %p123, %p124
      %p126 = scmp.ne.s32.totalorder %s117, %s118
      %p127 = scmp.eq.s32.totalorder %s23, 0
      %p128 = por %p126, %p127
      %p129 = scmp.ne.s32.totalorder %s117, %s118
      %p130 = scmp.eq.s32.totalorder %s24, 1
      %p131 = por %p129, %p130
      %p133 = scmp.ne.s32.totalorder %s118, %s132
      %p134 = scmp.eq.s32.totalorder %s24, 0
      %p135 = por %p133, %p134
      %s136 = ssub.s32 %s18, %s25
      %p137 = scmp.eq.s32.totalorder %s136, 0
      %s139 = sadd.s32 %s138, 1
      %s140 = scalar_select %p137, %s138, %s139
      %p143 = pneg %p137
      %p144 = scmp.eq.s32.totalorder %s18, 1
      %p145 = por %p143, %p144
      %p146 = scmp.ne.s32.totalorder %s138, %s141
      %p147 = scmp.eq.s32.totalorder %s18, 0
      %p148 = por %p146, %p147
      %p149 = scmp.ne.s32.totalorder %s138, %s141
      %p150 = scmp.eq.s32.totalorder %s23, 1
      %p151 = por %p149, %p150
      %p152 = scmp.ne.s32.totalorder %s141, %s142
      %p153 = scmp.eq.s32.totalorder %s23, 0
      %p154 = por %p152, %p153
      %p155 = scmp.ne.s32.totalorder %s141, %s142
      %p156 = scmp.eq.s32.totalorder %s24, 1
      %p157 = por %p155, %p156
      %p159 = scmp.ne.s32.totalorder %s142, %s158
      %p160 = scmp.eq.s32.totalorder %s24, 0
      %p161 = por %p159, %p160
      %p162 = scmp.le.s32.totalorder 1, %s18
      %p163 = scmp.lt.s32.totalorder %s18, 3
      %p164 = pnand %p162, %p163
      %p165 = pneg %p164
      // Predicated region
      $region9: #{tpu_custom_call.1} parent=5 // pred_check
        _
      $region10: #{tpu_custom_call.1} parent=5 // pred_check_branch
        %167 = sbr.rel (%p164) target = $region12
      $region11: #{tpu_custom_call.1} parent=5 // pred_region
        %s168 = ssub.s32 %s18, 1
        // Predicated region
        $region13: #{tpu_custom_call.1} parent=11 // pred_check
          %p169 = pneg %p65
        $region14: #{tpu_custom_call.1} parent=11 // pred_check_branch
          %171 = sbr.rel (%p169) target = $region16
        $region15: #{tpu_custom_call.1} parent=11 // pred_region
          %s173 = ssub.s32 3072, 3072
          %174 = vsyncadd [#allocation8], %s173
          %s175 = sshll.u32 [#allocation7], 4
          %s176 = int_to_ptr.vmem [resolvable:$true] %s175
          %181 = dma.hbm_to_vmem [thread:$0]  %s1, 3072, %s176, [#allocation8], 128, 128, 8
        $region16: #{tpu_custom_call.1} parent=11 // pred_fallthru
          _
        // Predicated region
        $region17: #{tpu_custom_call.1} parent=11 // pred_check
          %p182 = pneg %p86
        $region18: #{tpu_custom_call.1} parent=11 // pred_check_branch
          %184 = sbr.rel (%p182) target = $region20
        $region19: #{tpu_custom_call.1} parent=11 // pred_region
          _
        $region20: #{tpu_custom_call.1} parent=11 // pred_fallthru
          _
        // Predicated region
        $region21: #{tpu_custom_call.1} parent=11 // pred_check
          %p185 = pneg %p107
        $region22: #{tpu_custom_call.1} parent=11 // pred_check_branch
          %187 = sbr.rel (%p185) target = $region24
        $region23: #{tpu_custom_call.1} parent=11 // pred_region
          %s189 = ssub.s32 6144, 6144
          %190 = vsyncadd [#allocation8], %s189
          %s191 = sshll.u32 [#allocation9], 4
          %s192 = int_to_ptr.vmem [resolvable:$true] %s191
          %197 = dma.hbm_to_vmem [thread:$0]  %s3, 6144, %s192, [#allocation8], 128, 128, 8
        $region24: #{tpu_custom_call.1} parent=11 // pred_fallthru
          _
        // Predicated region
        $region25: #{tpu_custom_call.1} parent=11 // pred_check
          %p198 = pneg %p128
        $region26: #{tpu_custom_call.1} parent=11 // pred_check_branch
          %200 = sbr.rel (%p198) target = $region28
        $region27: #{tpu_custom_call.1} parent=11 // pred_region
          _
        $region28: #{tpu_custom_call.1} parent=11 // pred_fallthru
          _
      $region12: #{tpu_custom_call.1} parent=5 // pred_fallthru
        _
      %p201 = scmp.lt.s32.totalorder %s18, 2
      // Predicated region
      $region29: #{tpu_custom_call.1} parent=5 // pred_check
        %p202 = pneg %p201
      $region30: #{tpu_custom_call.1} parent=5 // pred_check_branch
        %204 = sbr.rel (%p202) target = $region32
      $region31: #{tpu_custom_call.1} parent=5 // pred_region
        // Predicated region
        $region33: #{tpu_custom_call.1} parent=31 // pred_check
          %p205 = pneg %p38
        $region34: #{tpu_custom_call.1} parent=31 // pred_check_branch
          %207 = sbr.rel (%p205) target = $region36
        $region35: #{tpu_custom_call.1} parent=31 // pred_region
          %s208 = sand.u32 %s28, 1
          %s209 = scalar_lea.sflag [#allocation5], %s208
          %s210 = sand.u32 %s28, 1
          %s211 = smul.addr %s210, 16
          %s212 = scalar_lea.vmem [#allocation4], %s211
          %s214 = ssub.s32 256, 256
          %215 = vsyncadd %s209, %s214
          %s216 = smul.addr %s18, 2
          %s217 = smul.addr %s216, 128
          %s218 = scalar_lea.hbm %s0, %s217
          %s219 = sshll.u32 %s212, 4
          %s220 = int_to_ptr.vmem [resolvable:$true] %s219
          %225 = dma.hbm_to_vmem [thread:$0]  %s218, 256, %s220, %s209, 128, 128, 8
        $region36: #{tpu_custom_call.1} parent=31 // pred_fallthru
          _
      $region32: #{tpu_custom_call.1} parent=5 // pred_fallthru
        _
      %p226 = scmp.le.s32.totalorder 1, %s18
      %p227 = scmp.lt.s32.totalorder %s18, 3
      %p228 = pnand %p226, %p227
      %p229 = pneg %p228
      // Predicated region
      $region37: #{tpu_custom_call.1} parent=5 // pred_check
        _
      $region38: #{tpu_custom_call.1} parent=5 // pred_check_branch
        %231 = sbr.rel (%p228) target = $region40
      $region39: #{tpu_custom_call.1} parent=5 // pred_region
        %s232 = ssub.s32 %s18, 1
        %s233 = sand.u32 %s31, 1
        %s234 = scalar_lea.sflag [#allocation5], %s233
        %s235 = sand.u32 %s31, 1
        %s236 = smul.addr %s235, 16
        %s237 = scalar_lea.vmem [#allocation4], %s236
        // Predicated region
        $region41: #{tpu_custom_call.1} parent=39 // pred_check
          %p238 = pneg %p44
        $region42: #{tpu_custom_call.1} parent=39 // pred_check_branch
          %240 = sbr.rel (%p238) target = $region44
        $region43: #{tpu_custom_call.1} parent=39 // pred_region
          %241 = dma.done %s234, 256
        $region44: #{tpu_custom_call.1} parent=39 // pred_fallthru
          _
        // Predicated region
        $region45: #{tpu_custom_call.1} parent=39 // pred_check
          %p242 = pneg %p65
        $region46: #{tpu_custom_call.1} parent=39 // pred_check_branch
          %244 = sbr.rel (%p242) target = $region48
        $region47: #{tpu_custom_call.1} parent=39 // pred_region
          %245 = dma.done [#allocation8], 3072
        $region48: #{tpu_custom_call.1} parent=39 // pred_fallthru
          _
        // Predicated region
        $region49: #{tpu_custom_call.1} parent=39 // pred_check
          %p246 = pneg %p107
        $region50: #{tpu_custom_call.1} parent=39 // pred_check_branch
          %248 = sbr.rel (%p246) target = $region52
        $region51: #{tpu_custom_call.1} parent=39 // pred_region
          %249 = dma.done [#allocation8], 6144
        $region52: #{tpu_custom_call.1} parent=39 // pred_fallthru
          _
        %s250 = sand.u32 %s31, 1
        %s251 = scalar_lea.sflag [#allocation5], %s250
        %s252 = sand.u32 %s31, 1
        %s253 = smul.addr %s252, 16
        %s254 = scalar_lea.vmem [#allocation4], %s253
        %p255 = pneg %p44
        %p256 = pneg %p41
        %p257 = pneg %p65
        %p258 = pneg %p62
        %p259 = pneg %p86
        %p260 = pneg %p83
        %p261 = pneg %p107
        %p262 = pneg %p104
        %p263 = pneg %p128
        %p264 = pneg %p125
        %p265 = pneg %p154
        %p266 = pneg %p151
        %s267 = sand.u32 %s141, 1
        %s268 = scalar_lea.sflag [#allocation6], %s267
        %s269 = sand.u32 %s141, 1
        %s270 = smul.addr %s269, 16
        %s271 = scalar_lea.vmem [#allocation10], %s270
        %p272 = scmp.eq.s32.totalorder %s23, 0
        // Predicated region
        $region53: #{tpu_custom_call.1} parent=39 // pred_check
          %p273 = pneg %p272
        $region54: #{tpu_custom_call.1} parent=39 // pred_check_branch
          %275 = sbr.rel (%p273) target = $region56
        $region55: #{tpu_custom_call.1} parent=39 // pred_region
          %vm276 = vcmask 516096
          %277 = vst.msk [vmem:[#allocation2] sm:$0x1] %vm276, 0.0
          %278 = vst.msk [vmem:[#allocation2 + $0x11] sm:$0x1] %vm276, 0.0
          %279 = vst [vmem:[#allocation3] sm:$0x1] 0.0
          %280 = vst [vmem:[#allocation3 + $0x11] sm:$0x1] 0.0
        $region56: #{tpu_custom_call.1} parent=39 // pred_fallthru
          _
        %v281 = vld [vmem:[%s237] sm:$0xff]
        %v282 = vld [vmem:[%s237 + $0x8] sm:$0xff]
        %vm283 = vcmask 523264
        %284 = vst.msk [vmem:[#allocation2 + $0x1] sm:$0xff] %vm283, %v281
        %285 = vst.msk [vmem:[#allocation2 + $0x9] sm:$0xff] %vm283, %v282
        %v286 = vld [vmem:[#allocation2] sm:$0xff]
        %v287 = vld [vmem:[#allocation2 + $0x8] sm:$0xff]
        %v288 = vld [vmem:[#allocation7] sm:$0xff]
        %v289 = vld [vmem:[#allocation7 + $0x8] sm:$0xff]
        %v290 = vld [vmem:[#allocation7 + $0x10] sm:$0xff]
        %v291 = vld [vmem:[#allocation7 + $0x18] sm:$0xff]
        %v292 = vld [vmem:[#allocation7 + $0x20] sm:$0xff]
        %v293 = vld [vmem:[#allocation7 + $0x28] sm:$0xff]
        %v294 = vld [vmem:[#allocation7 + $0x30] sm:$0xff]
        %v295 = vld [vmem:[#allocation7 + $0x38] sm:$0xff]
        %v296 = vld [vmem:[#allocation2 + $0x1] sm:$0xff]
        %v297 = vld [vmem:[#allocation2 + $0x9] sm:$0xff]
        %s298 = scalar_lea.vmem [#allocation7], 64
        %v299 = vld [vmem:[%s298] sm:$0xff]
        %v300 = vld [vmem:[%s298 + $0x8] sm:$0xff]
        %v301 = vld [vmem:[%s298 + $0x10] sm:$0xff]
        %v302 = vld [vmem:[%s298 + $0x18] sm:$0xff]
        %v303 = vld [vmem:[%s298 + $0x20] sm:$0xff]
        %v304 = vld [vmem:[%s298 + $0x28] sm:$0xff]
        %v305 = vld [vmem:[%s298 + $0x30] sm:$0xff]
        %v306 = vld [vmem:[%s298 + $0x38] sm:$0xff]
        %v308 = vsel %vm283, %v296, 0
        %v311 = vsel %vm283, %v297, 0
        %313 = vmatprep.subr.mxu0 0.0
        %314 = vmatpush1.msra.mxu0 %v299
        %315 = vmatprep.subr.mxu0 0.0
        %316 = vmatpush1.msra.mxu0 %v300
        %317 = vmatprep.subr.mxu0 0.0
        %318 = vmatpush1.msra.mxu0 %v301
        %319 = vmatprep.subr.mxu0 0.0
        %320 = vmatpush1.msra.mxu0 %v302
        %321 = vmatprep.subr.mxu0 0.0
        %322 = vmatpush1.msra.mxu0 %v303
        %323 = vmatprep.subr.mxu0 0.0
        %324 = vmatpush1.msra.mxu0 %v304
        %325 = vmatprep.subr.mxu0 0.0
        %326 = vmatpush1.msra.mxu0 %v305
        %327 = vmatprep.subr.mxu0 0.0
        %328 = vmatpush1.msra.mxu0 %v306
        %329 = vmatprep.subr.mxu0 0.0
        %330 = vmatpush1.msra.mxu0 0.0
        %331 = vmatprep.subr.mxu0 0.0
        %332 = vmatpush1.msra.mxu0 0.0
        %333 = vmatprep.subr.mxu0 0.0
        %334 = vmatpush1.msra.mxu0 0.0
        %335 = vmatprep.subr.mxu0 0.0
        %336 = vmatpush1.msra.mxu0 0.0
        %337 = vmatprep.subr.mxu0 0.0
        %338 = vmatpush1.msra.mxu0 0.0
        %339 = vmatprep.subr.mxu0 0.0
        %340 = vmatpush1.msra.mxu0 0.0
        %341 = vmatprep.subr.mxu0 0.0
        %342 = vmatpush1.msra.mxu0 0.0
        %343 = vmatprep.subr.mxu0 0.0
        %344 = vmatpush1.msra.mxu0 0.0
        %345 = vmatprep.subr.mxu0 0.0
        %346 = vmatpush1.msra.mxu0 0.0
        %347 = vmatprep.subr.mxu0 0.0
        %348 = vmatpush1.msra.mxu0 0.0
        %349 = vmatprep.subr.mxu0 0.0
        %350 = vmatpush1.msra.mxu0 0.0
        %351 = vmatprep.subr.mxu0 0.0
        %352 = vmatpush1.msra.mxu0 0.0
        %353 = vmatprep.subr.mxu0 0.0
        %354 = vmatpush1.msra.mxu0 0.0
        %355 = vmatprep.subr.mxu0 0.0
        %356 = vmatpush1.msra.mxu0 0.0
        %357 = vmatprep.subr.mxu0 0.0
        %358 = vmatpush1.msra.mxu0 0.0
        %359 = vmatprep.subr.mxu0 0.0
        %360 = vmatpush1.msra.mxu0 0.0
        %361 = vmatprep.subr.mxu0 0.0
        %362 = vmatpush1.msra.mxu0 0.0
        %363 = vmatprep.subr.mxu0 0.0
        %364 = vmatpush1.msra.mxu0 0.0
        %365 = vmatprep.subr.mxu0 0.0
        %366 = vmatpush1.msra.mxu0 0.0
        %367 = vmatprep.subr.mxu0 0.0
        %368 = vmatpush1.msra.mxu0 0.0
        %369 = vmatprep.subr.mxu0 0.0
        %370 = vmatpush1.msra.mxu0 0.0
        %371 = vmatprep.subr.mxu0 0.0
        %372 = vmatpush1.msra.mxu0 0.0
        %373 = vmatprep.subr.mxu0 0.0
        %374 = vmatpush1.msra.mxu0 0.0
        %375 = vmatprep.subr.mxu0 0.0
        %376 = vmatpush1.msra.mxu0 0.0
        %377 = vmatprep.mubr.f32.mxu0 0.0
        %378 = vmatmul.mubr.f32.gmra.mrb[0].mxu0 %v308
        %v379 = vpop.f32.mrb[0].mxu0
        %v380 = vadd.f32 0.0, %v379
        %v381 = vpop.f32.mrb[0].mxu0
        %382 = vmatprep.mubr.f32.mxu0 0.0
        %383 = vmatmul.mubr.f32.gmra.mrb[0].mxu0 %v311
        %v384 = vpop.f32.mrb[0].mxu0
        %v385 = vadd.f32 0.0, %v384
        %v386 = vpop.f32.mrb[0].mxu0
        %387 = vdwg.mxu0
        %v389 = vsel %vm283, %v286, 0
        %v392 = vsel %vm283, %v287, 0
        %394 = vmatprep.subr.mxu0 0.0
        %395 = vmatpush1.msra.mxu0 %v288
        %396 = vmatprep.subr.mxu0 0.0
        %397 = vmatpush1.msra.mxu0 %v289
        %398 = vmatprep.subr.mxu0 0.0
        %399 = vmatpush1.msra.mxu0 %v290
        %400 = vmatprep.subr.mxu0 0.0
        %401 = vmatpush1.msra.mxu0 %v291
        %402 = vmatprep.subr.mxu0 0.0
        %403 = vmatpush1.msra.mxu0 %v292
        %404 = vmatprep.subr.mxu0 0.0
        %405 = vmatpush1.msra.mxu0 %v293
        %406 = vmatprep.subr.mxu0 0.0
        %407 = vmatpush1.msra.mxu0 %v294
        %408 = vmatprep.subr.mxu0 0.0
        %409 = vmatpush1.msra.mxu0 %v295
        %410 = vmatprep.subr.mxu0 0.0
        %411 = vmatpush1.msra.mxu0 0.0
        %412 = vmatprep.subr.mxu0 0.0
        %413 = vmatpush1.msra.mxu0 0.0
        %414 = vmatprep.subr.mxu0 0.0
        %415 = vmatpush1.msra.mxu0 0.0
        %416 = vmatprep.subr.mxu0 0.0
        %417 = vmatpush1.msra.mxu0 0.0
        %418 = vmatprep.subr.mxu0 0.0
        %419 = vmatpush1.msra.mxu0 0.0
        %420 = vmatprep.subr.mxu0 0.0
        %421 = vmatpush1.msra.mxu0 0.0
        %422 = vmatprep.subr.mxu0 0.0
        %423 = vmatpush1.msra.mxu0 0.0
        %424 = vmatprep.subr.mxu0 0.0
        %425 = vmatpush1.msra.mxu0 0.0
        %426 = vmatprep.subr.mxu0 0.0
        %427 = vmatpush1.msra.mxu0 0.0
        %428 = vmatprep.subr.mxu0 0.0
        %429 = vmatpush1.msra.mxu0 0.0
        %430 = vmatprep.subr.mxu0 0.0
        %431 = vmatpush1.msra.mxu0 0.0
        %432 = vmatprep.subr.mxu0 0.0
        %433 = vmatpush1.msra.mxu0 0.0
        %434 = vmatprep.subr.mxu0 0.0
        %435 = vmatpush1.msra.mxu0 0.0
        %436 = vmatprep.subr.mxu0 0.0
        %437 = vmatpush1.msra.mxu0 0.0
        %438 = vmatprep.subr.mxu0 0.0
        %439 = vmatpush1.msra.mxu0 0.0
        %440 = vmatprep.subr.mxu0 0.0
        %441 = vmatpush1.msra.mxu0 0.0
        %442 = vmatprep.subr.mxu0 0.0
        %443 = vmatpush1.msra.mxu0 0.0
        %444 = vmatprep.subr.mxu0 0.0
        %445 = vmatpush1.msra.mxu0 0.0
        %446 = vmatprep.subr.mxu0 0.0
        %447 = vmatpush1.msra.mxu0 0.0
        %448 = vmatprep.subr.mxu0 0.0
        %449 = vmatpush1.msra.mxu0 0.0
        %450 = vmatprep.subr.mxu0 0.0
        %451 = vmatpush1.msra.mxu0 0.0
        %452 = vmatprep.subr.mxu0 0.0
        %453 = vmatpush1.msra.mxu0 0.0
        %454 = vmatprep.subr.mxu0 0.0
        %455 = vmatpush1.msra.mxu0 0.0
        %456 = vmatprep.subr.mxu0 0.0
        %457 = vmatpush1.msra.mxu0 0.0
        %458 = vmatprep.mubr.f32.mxu0 0.0
        %459 = vmatmul.mubr.f32.gmra.mrb[0].mxu0 %v389
        %v460 = vpop.f32.mrb[0].mxu0
        %v461 = vadd.f32 %v380, %v460
        %v462 = vpop.f32.mrb[0].mxu0
        %463 = vmatprep.mubr.f32.mxu0 0.0
        %464 = vmatmul.mubr.f32.gmra.mrb[0].mxu0 %v392
        %v465 = vpop.f32.mrb[0].mxu0
        %v466 = vadd.f32 %v385, %v465
        %v467 = vpop.f32.mrb[0].mxu0
        %468 = vdwg.mxu0
        %v469 = vld [vmem:[#allocation2 + $0x2] sm:$0xff]
        %v470 = vld [vmem:[#allocation2 + $0xa] sm:$0xff]
        %s471 = scalar_lea.vmem [#allocation7], 128
        %v472 = vld [vmem:[%s471] sm:$0xff]
        %v473 = vld [vmem:[%s471 + $0x8] sm:$0xff]
        %v474 = vld [vmem:[%s471 + $0x10] sm:$0xff]
        %v475 = vld [vmem:[%s471 + $0x18] sm:$0xff]
        %v476 = vld [vmem:[%s471 + $0x20] sm:$0xff]
        %v477 = vld [vmem:[%s471 + $0x28] sm:$0xff]
        %v478 = vld [vmem:[%s471 + $0x30] sm:$0xff]
        %v479 = vld [vmem:[%s471 + $0x38] sm:$0xff]
        %v481 = vsel %vm283, %v469, 0
        %v484 = vsel %vm283, %v470, 0
        %486 = vmatprep.subr.mxu0 0.0
        %487 = vmatpush1.msra.mxu0 %v472
        %488 = vmatprep.subr.mxu0 0.0
        %489 = vmatpush1.msra.mxu0 %v473
        %490 = vmatprep.subr.mxu0 0.0
        %491 = vmatpush1.msra.mxu0 %v474
        %492 = vmatprep.subr.mxu0 0.0
        %493 = vmatpush1.msra.mxu0 %v475
        %494 = vmatprep.subr.mxu0 0.0
        %495 = vmatpush1.msra.mxu0 %v476
        %496 = vmatprep.subr.mxu0 0.0
        %497 = vmatpush1.msra.mxu0 %v477
        %498 = vmatprep.subr.mxu0 0.0
        %499 = vmatpush1.msra.mxu0 %v478
        %500 = vmatprep.subr.mxu0 0.0
        %501 = vmatpush1.msra.mxu0 %v479
        %502 = vmatprep.subr.mxu0 0.0
        %503 = vmatpush1.msra.mxu0 0.0
        %504 = vmatprep.subr.mxu0 0.0
        %505 = vmatpush1.msra.mxu0 0.0
        %506 = vmatprep.subr.mxu0 0.0
        %507 = vmatpush1.msra.mxu0 0.0
        %508 = vmatprep.subr.mxu0 0.0
        %509 = vmatpush1.msra.mxu0 0.0
        %510 = vmatprep.subr.mxu0 0.0
        %511 = vmatpush1.msra.mxu0 0.0
        %512 = vmatprep.subr.mxu0 0.0
        %513 = vmatpush1.msra.mxu0 0.0
        %514 = vmatprep.subr.mxu0 0.0
        %515 = vmatpush1.msra.mxu0 0.0
        %516 = vmatprep.subr.mxu0 0.0
        %517 = vmatpush1.msra.mxu0 0.0
        %518 = vmatprep.subr.mxu0 0.0
        %519 = vmatpush1.msra.mxu0 0.0
        %520 = vmatprep.subr.mxu0 0.0
        %521 = vmatpush1.msra.mxu0 0.0
        %522 = vmatprep.subr.mxu0 0.0
        %523 = vmatpush1.msra.mxu0 0.0
        %524 = vmatprep.subr.mxu0 0.0
        %525 = vmatpush1.msra.mxu0 0.0
        %526 = vmatprep.subr.mxu0 0.0
        %527 = vmatpush1.msra.mxu0 0.0
        %528 = vmatprep.subr.mxu0 0.0
        %529 = vmatpush1.msra.mxu0 0.0
        %530 = vmatprep.subr.mxu0 0.0
        %531 = vmatpush1.msra.mxu0 0.0
        %532 = vmatprep.subr.mxu0 0.0
        %533 = vmatpush1.msra.mxu0 0.0
        %534 = vmatprep.subr.mxu0 0.0
        %535 = vmatpush1.msra.mxu0 0.0
        %536 = vmatprep.subr.mxu0 0.0
        %537 = vmatpush1.msra.mxu0 0.0
        %538 = vmatprep.subr.mxu0 0.0
        %539 = vmatpush1.msra.mxu0 0.0
        %540 = vmatprep.subr.mxu0 0.0
        %541 = vmatpush1.msra.mxu0 0.0
        %542 = vmatprep.subr.mxu0 0.0
        %543 = vmatpush1.msra.mxu0 0.0
        %544 = vmatprep.subr.mxu0 0.0
        %545 = vmatpush1.msra.mxu0 0.0
        %546 = vmatprep.subr.mxu0 0.0
        %547 = vmatpush1.msra.mxu0 0.0
        %548 = vmatprep.subr.mxu0 0.0
        %549 = vmatpush1.msra.mxu0 0.0
        %550 = vmatprep.mubr.f32.mxu0 0.0
        %551 = vmatmul.mubr.f32.gmra.mrb[0].mxu0 %v481
        %v552 = vpop.f32.mrb[0].mxu0
        %v553 = vadd.f32 0.0, %v552
        %v554 = vpop.f32.mrb[0].mxu0
        %555 = vmatprep.mubr.f32.mxu0 0.0
        %556 = vmatmul.mubr.f32.gmra.mrb[0].mxu0 %v484
        %v557 = vpop.f32.mrb[0].mxu0
        %v558 = vadd.f32 0.0, %v557
        %v559 = vpop.f32.mrb[0].mxu0
        %560 = vdwg.mxu0
        %v561 = vadd.f32 %v461, %v553
        %v562 = vadd.f32 %v466, %v558
        %v563 = vld [vmem:[%s2] sm:$0x1]
        %v565 = vlaneseq
        %v566 = vshrl.u32 %v565, 7
        %v567 = vsub.s32 0, %v566
        %v568 = vrot.slane %v563, %v567
        %v570 = vadd.f32 %v561, %v568
        %v571 = vadd.f32 %v562, %v568
        %v572 = vmax.f32 %v570, 0.0
        %v573 = vmax.f32 %v571, 0.0
        %574 = vst [vmem:[#allocation3 + $0x1] sm:$0xff] %v572
        %575 = vst [vmem:[#allocation3 + $0x9] sm:$0xff] %v573
        %v576 = vld [vmem:[#allocation3] sm:$0xff]
        %v577 = vld [vmem:[#allocation3 + $0x8] sm:$0xff]
        %v578 = vld [vmem:[#allocation9] sm:$0xff]
        %v579 = vld [vmem:[#allocation9 + $0x8] sm:$0xff]
        %v580 = vld [vmem:[#allocation9 + $0x10] sm:$0xff]
        %v581 = vld [vmem:[#allocation9 + $0x18] sm:$0xff]
        %v582 = vld [vmem:[#allocation9 + $0x20] sm:$0xff]
        %v583 = vld [vmem:[#allocation9 + $0x28] sm:$0xff]
        %v584 = vld [vmem:[#allocation9 + $0x30] sm:$0xff]
        %v585 = vld [vmem:[#allocation9 + $0x38] sm:$0xff]
        %v586 = vld [vmem:[#allocation9 + $0x40] sm:$0xff]
        %v587 = vld [vmem:[#allocation9 + $0x48] sm:$0xff]
        %v588 = vld [vmem:[#allocation9 + $0x50] sm:$0xff]
        %v589 = vld [vmem:[#allocation9 + $0x58] sm:$0xff]
        %v590 = vld [vmem:[#allocation9 + $0x60] sm:$0xff]
        %v591 = vld [vmem:[#allocation9 + $0x68] sm:$0xff]
        %v592 = vld [vmem:[#allocation9 + $0x70] sm:$0xff]
        %v593 = vld [vmem:[#allocation9 + $0x78] sm:$0xff]
        %v594 = vld [vmem:[#allocation3 + $0x1] sm:$0xff]
        %v595 = vld [vmem:[#allocation3 + $0x9] sm:$0xff]
        %s596 = scalar_lea.vmem [#allocation9], 128
        %v597 = vld [vmem:[%s596] sm:$0xff]
        %v598 = vld [vmem:[%s596 + $0x8] sm:$0xff]
        %v599 = vld [vmem:[%s596 + $0x10] sm:$0xff]
        %v600 = vld [vmem:[%s596 + $0x18] sm:$0xff]
        %v601 = vld [vmem:[%s596 + $0x20] sm:$0xff]
        %v602 = vld [vmem:[%s596 + $0x28] sm:$0xff]
        %v603 = vld [vmem:[%s596 + $0x30] sm:$0xff]
        %v604 = vld [vmem:[%s596 + $0x38] sm:$0xff]
        %v605 = vld [vmem:[%s596 + $0x40] sm:$0xff]
        %v606 = vld [vmem:[%s596 + $0x48] sm:$0xff]
        %v607 = vld [vmem:[%s596 + $0x50] sm:$0xff]
        %v608 = vld [vmem:[%s596 + $0x58] sm:$0xff]
        %v609 = vld [vmem:[%s596 + $0x60] sm:$0xff]
        %v610 = vld [vmem:[%s596 + $0x68] sm:$0xff]
        %v611 = vld [vmem:[%s596 + $0x70] sm:$0xff]
        %v612 = vld [vmem:[%s596 + $0x78] sm:$0xff]
        %613 = vmatprep.subr.mxu0 0.0
        %614 = vmatpush1.msra.mxu0 %v597
        %615 = vmatprep.subr.mxu0 0.0
        %616 = vmatpush1.msra.mxu0 %v598
        %617 = vmatprep.subr.mxu0 0.0
        %618 = vmatpush1.msra.mxu0 %v599
        %619 = vmatprep.subr.mxu0 0.0
        %620 = vmatpush1.msra.mxu0 %v600
        %621 = vmatprep.subr.mxu0 0.0
        %622 = vmatpush1.msra.mxu0 %v601
        %623 = vmatprep.subr.mxu0 0.0
        %624 = vmatpush1.msra.mxu0 %v602
        %625 = vmatprep.subr.mxu0 0.0
        %626 = vmatpush1.msra.mxu0 %v603
        %627 = vmatprep.subr.mxu0 0.0
        %628 = vmatpush1.msra.mxu0 %v604
        %629 = vmatprep.subr.mxu0 0.0
        %630 = vmatpush1.msra.mxu0 %v605
        %631 = vmatprep.subr.mxu0 0.0
        %632 = vmatpush1.msra.mxu0 %v606
        %633 = vmatprep.subr.mxu0 0.0
        %634 = vmatpush1.msra.mxu0 %v607
        %635 = vmatprep.subr.mxu0 0.0
        %636 = vmatpush1.msra.mxu0 %v608
        %637 = vmatprep.subr.mxu0 0.0
        %638 = vmatpush1.msra.mxu0 %v609
        %639 = vmatprep.subr.mxu0 0.0
        %640 = vmatpush1.msra.mxu0 %v610
        %641 = vmatprep.subr.mxu0 0.0
        %642 = vmatpush1.msra.mxu0 %v611
        %643 = vmatprep.subr.mxu0 0.0
        %644 = vmatpush1.msra.mxu0 %v612
        %645 = vmatprep.subr.mxu0 0.0
        %646 = vmatpush1.msra.mxu0 0.0
        %647 = vmatprep.subr.mxu0 0.0
        %648 = vmatpush1.msra.mxu0 0.0
        %649 = vmatprep.subr.mxu0 0.0
        %650 = vmatpush1.msra.mxu0 0.0
        %651 = vmatprep.subr.mxu0 0.0
        %652 = vmatpush1.msra.mxu0 0.0
        %653 = vmatprep.subr.mxu0 0.0
        %654 = vmatpush1.msra.mxu0 0.0
        %655 = vmatprep.subr.mxu0 0.0
        %656 = vmatpush1.msra.mxu0 0.0
        %657 = vmatprep.subr.mxu0 0.0
        %658 = vmatpush1.msra.mxu0 0.0
        %659 = vmatprep.subr.mxu0 0.0
        %660 = vmatpush1.msra.mxu0 0.0
        %661 = vmatprep.subr.mxu0 0.0
        %662 = vmatpush1.msra.mxu0 0.0
        %663 = vmatprep.subr.mxu0 0.0
        %664 = vmatpush1.msra.mxu0 0.0
        %665 = vmatprep.subr.mxu0 0.0
        %666 = vmatpush1.msra.mxu0 0.0
        %667 = vmatprep.subr.mxu0 0.0
        %668 = vmatpush1.msra.mxu0 0.0
        %669 = vmatprep.subr.mxu0 0.0
        %670 = vmatpush1.msra.mxu0 0.0
        %671 = vmatprep.subr.mxu0 0.0
        %672 = vmatpush1.msra.mxu0 0.0
        %673 = vmatprep.subr.mxu0 0.0
        %674 = vmatpush1.msra.mxu0 0.0
        %675 = vmatprep.subr.mxu0 0.0
        %676 = vmatpush1.msra.mxu0 0.0
        %677 = vmatprep.mubr.f32.mxu0 0.0
        %678 = vmatmul.mubr.f32.gmra.mrb[0].mxu0 %v594
        %v679 = vpop.f32.mrb[0].mxu0
        %v680 = vadd.f32 0.0, %v679
        %v681 = vpop.f32.mrb[0].mxu0
        %682 = vmatprep.mubr.f32.mxu0 0.0
        %683 = vmatmul.mubr.f32.gmra.mrb[0].mxu0 %v595
        %v684 = vpop.f32.mrb[0].mxu0
        %v685 = vadd.f32 0.0, %v684
        %v686 = vpop.f32.mrb[0].mxu0
        %687 = vdwg.mxu0
        %688 = vmatprep.subr.mxu0 0.0
        %689 = vmatpush1.msra.mxu0 %v578
        %690 = vmatprep.subr.mxu0 0.0
        %691 = vmatpush1.msra.mxu0 %v579
        %692 = vmatprep.subr.mxu0 0.0
        %693 = vmatpush1.msra.mxu0 %v580
        %694 = vmatprep.subr.mxu0 0.0
        %695 = vmatpush1.msra.mxu0 %v581
        %696 = vmatprep.subr.mxu0 0.0
        %697 = vmatpush1.msra.mxu0 %v582
        %698 = vmatprep.subr.mxu0 0.0
        %699 = vmatpush1.msra.mxu0 %v583
        %700 = vmatprep.subr.mxu0 0.0
        %701 = vmatpush1.msra.mxu0 %v584
        %702 = vmatprep.subr.mxu0 0.0
        %703 = vmatpush1.msra.mxu0 %v585
        %704 = vmatprep.subr.mxu0 0.0
        %705 = vmatpush1.msra.mxu0 %v586
        %706 = vmatprep.subr.mxu0 0.0
        %707 = vmatpush1.msra.mxu0 %v587
        %708 = vmatprep.subr.mxu0 0.0
        %709 = vmatpush1.msra.mxu0 %v588
        %710 = vmatprep.subr.mxu0 0.0
        %711 = vmatpush1.msra.mxu0 %v589
        %712 = vmatprep.subr.mxu0 0.0
        %713 = vmatpush1.msra.mxu0 %v590
        %714 = vmatprep.subr.mxu0 0.0
        %715 = vmatpush1.msra.mxu0 %v591
        %716 = vmatprep.subr.mxu0 0.0
        %717 = vmatpush1.msra.mxu0 %v592
        %718 = vmatprep.subr.mxu0 0.0
        %719 = vmatpush1.msra.mxu0 %v593
        %720 = vmatprep.subr.mxu0 0.0
        %721 = vmatpush1.msra.mxu0 0.0
        %722 = vmatprep.subr.mxu0 0.0
        %723 = vmatpush1.msra.mxu0 0.0
        %724 = vmatprep.subr.mxu0 0.0
        %725 = vmatpush1.msra.mxu0 0.0
        %726 = vmatprep.subr.mxu0 0.0
        %727 = vmatpush1.msra.mxu0 0.0
        %728 = vmatprep.subr.mxu0 0.0
        %729 = vmatpush1.msra.mxu0 0.0
        %730 = vmatprep.subr.mxu0 0.0
        %731 = vmatpush1.msra.mxu0 0.0
        %732 = vmatprep.subr.mxu0 0.0
        %733 = vmatpush1.msra.mxu0 0.0
        %734 = vmatprep.subr.mxu0 0.0
        %735 = vmatpush1.msra.mxu0 0.0
        %736 = vmatprep.subr.mxu0 0.0
        %737 = vmatpush1.msra.mxu0 0.0
        %738 = vmatprep.subr.mxu0 0.0
        %739 = vmatpush1.msra.mxu0 0.0
        %740 = vmatprep.subr.mxu0 0.0
        %741 = vmatpush1.msra.mxu0 0.0
        %742 = vmatprep.subr.mxu0 0.0
        %743 = vmatpush1.msra.mxu0 0.0
        %744 = vmatprep.subr.mxu0 0.0
        %745 = vmatpush1.msra.mxu0 0.0
        %746 = vmatprep.subr.mxu0 0.0
        %747 = vmatpush1.msra.mxu0 0.0
        %748 = vmatprep.subr.mxu0 0.0
        %749 = vmatpush1.msra.mxu0 0.0
        %750 = vmatprep.subr.mxu0 0.0
        %751 = vmatpush1.msra.mxu0 0.0
        %752 = vmatprep.mubr.f32.mxu0 0.0
        %753 = vmatmul.mubr.f32.gmra.mrb[0].mxu0 %v576
        %v754 = vpop.f32.mrb[0].mxu0
        %v755 = vadd.f32 %v680, %v754
        %v756 = vpop.f32.mrb[0].mxu0
        %757 = vmatprep.mubr.f32.mxu0 0.0
        %758 = vmatmul.mubr.f32.gmra.mrb[0].mxu0 %v577
        %v759 = vpop.f32.mrb[0].mxu0
        %v760 = vadd.f32 %v685, %v759
        %v761 = vpop.f32.mrb[0].mxu0
        %762 = vdwg.mxu0
        %v763 = vld [vmem:[#allocation3 + $0x2] sm:$0xff]
        %v764 = vld [vmem:[#allocation3 + $0xa] sm:$0xff]
        %s765 = scalar_lea.vmem [#allocation9], 256
        %v766 = vld [vmem:[%s765] sm:$0xff]
        %v767 = vld [vmem:[%s765 + $0x8] sm:$0xff]
        %v768 = vld [vmem:[%s765 + $0x10] sm:$0xff]
        %v769 = vld [vmem:[%s765 + $0x18] sm:$0xff]
        %v770 = vld [vmem:[%s765 + $0x20] sm:$0xff]
        %v771 = vld [vmem:[%s765 + $0x28] sm:$0xff]
        %v772 = vld [vmem:[%s765 + $0x30] sm:$0xff]
        %v773 = vld [vmem:[%s765 + $0x38] sm:$0xff]
        %v774 = vld [vmem:[%s765 + $0x40] sm:$0xff]
        %v775 = vld [vmem:[%s765 + $0x48] sm:$0xff]
        %v776 = vld [vmem:[%s765 + $0x50] sm:$0xff]
        %v777 = vld [vmem:[%s765 + $0x58] sm:$0xff]
        %v778 = vld [vmem:[%s765 + $0x60] sm:$0xff]
        %v779 = vld [vmem:[%s765 + $0x68] sm:$0xff]
        %v780 = vld [vmem:[%s765 + $0x70] sm:$0xff]
        %v781 = vld [vmem:[%s765 + $0x78] sm:$0xff]
        %782 = vmatprep.subr.mxu0 0.0
        %783 = vmatpush1.msra.mxu0 %v766
        %784 = vmatprep.subr.mxu0 0.0
        %785 = vmatpush1.msra.mxu0 %v767
        %786 = vmatprep.subr.mxu0 0.0
        %787 = vmatpush1.msra.mxu0 %v768
        %788 = vmatprep.subr.mxu0 0.0
        %789 = vmatpush1.msra.mxu0 %v769
        %790 = vmatprep.subr.mxu0 0.0
        %791 = vmatpush1.msra.mxu0 %v770
        %792 = vmatprep.subr.mxu0 0.0
        %793 = vmatpush1.msra.mxu0 %v771
        %794 = vmatprep.subr.mxu0 0.0
        %795 = vmatpush1.msra.mxu0 %v772
        %796 = vmatprep.subr.mxu0 0.0
        %797 = vmatpush1.msra.mxu0 %v773
        %798 = vmatprep.subr.mxu0 0.0
        %799 = vmatpush1.msra.mxu0 %v774
        %800 = vmatprep.subr.mxu0 0.0
        %801 = vmatpush1.msra.mxu0 %v775
        %802 = vmatprep.subr.mxu0 0.0
        %803 = vmatpush1.msra.mxu0 %v776
        %804 = vmatprep.subr.mxu0 0.0
        %805 = vmatpush1.msra.mxu0 %v777
        %806 = vmatprep.subr.mxu0 0.0
        %807 = vmatpush1.msra.mxu0 %v778
        %808 = vmatprep.subr.mxu0 0.0
        %809 = vmatpush1.msra.mxu0 %v779
        %810 = vmatprep.subr.mxu0 0.0
        %811 = vmatpush1.msra.mxu0 %v780
        %812 = vmatprep.subr.mxu0 0.0
        %813 = vmatpush1.msra.mxu0 %v781
        %814 = vmatprep.subr.mxu0 0.0
        %815 = vmatpush1.msra.mxu0 0.0
        %816 = vmatprep.subr.mxu0 0.0
        %817 = vmatpush1.msra.mxu0 0.0
        %818 = vmatprep.subr.mxu0 0.0
        %819 = vmatpush1.msra.mxu0 0.0
        %820 = vmatprep.subr.mxu0 0.0
        %821 = vmatpush1.msra.mxu0 0.0
        %822 = vmatprep.subr.mxu0 0.0
        %823 = vmatpush1.msra.mxu0 0.0
        %824 = vmatprep.subr.mxu0 0.0
        %825 = vmatpush1.msra.mxu0 0.0
        %826 = vmatprep.subr.mxu0 0.0
        %827 = vmatpush1.msra.mxu0 0.0
        %828 = vmatprep.subr.mxu0 0.0
        %829 = vmatpush1.msra.mxu0 0.0
        %830 = vmatprep.subr.mxu0 0.0
        %831 = vmatpush1.msra.mxu0 0.0
        %832 = vmatprep.subr.mxu0 0.0
        %833 = vmatpush1.msra.mxu0 0.0
        %834 = vmatprep.subr.mxu0 0.0
        %835 = vmatpush1.msra.mxu0 0.0
        %836 = vmatprep.subr.mxu0 0.0
        %837 = vmatpush1.msra.mxu0 0.0
        %838 = vmatprep.subr.mxu0 0.0
        %839 = vmatpush1.msra.mxu0 0.0
        %840 = vmatprep.subr.mxu0 0.0
        %841 = vmatpush1.msra.mxu0 0.0
        %842 = vmatprep.subr.mxu0 0.0
        %843 = vmatpush1.msra.mxu0 0.0
        %844 = vmatprep.subr.mxu0 0.0
        %845 = vmatpush1.msra.mxu0 0.0
        %846 = vmatprep.mubr.f32.mxu0 0.0
        %847 = vmatmul.mubr.f32.gmra.mrb[0].mxu0 %v763
        %v848 = vpop.f32.mrb[0].mxu0
        %v849 = vadd.f32 0.0, %v848
        %v850 = vpop.f32.mrb[0].mxu0
        %851 = vmatprep.mubr.f32.mxu0 0.0
        %852 = vmatmul.mubr.f32.gmra.mrb[0].mxu0 %v764
        %v853 = vpop.f32.mrb[0].mxu0
        %v854 = vadd.f32 0.0, %v853
        %v855 = vpop.f32.mrb[0].mxu0
        %856 = vdwg.mxu0
        %v857 = vadd.f32 %v755, %v849
        %v858 = vadd.f32 %v760, %v854
        %v859 = vld [vmem:[%s4] sm:$0x1]
        %v861 = vlaneseq
        %v862 = vshrl.u32 %v861, 7
        %v863 = vsub.s32 0, %v862
        %v864 = vrot.slane %v859, %v863
        %v866 = vadd.f32 %v857, %v864
        %v867 = vadd.f32 %v858, %v864
        %v868 = vmax.f32 %v866, 0.0
        %v869 = vmax.f32 %v867, 0.0
        %870 = vst [vmem:[%s271] sm:$0xff] %v868
        %871 = vst [vmem:[%s271 + $0x8] sm:$0xff] %v869
        %s872 = sand.u32 %s141, 1
        %s873 = scalar_lea.sflag [#allocation6], %s872
        %s874 = sand.u32 %s141, 1
        %s875 = smul.addr %s874, 16
        %s876 = scalar_lea.vmem [#allocation10], %s875
        // Predicated region
        $region57: #{tpu_custom_call.1} parent=39 // pred_check
          %p877 = pneg %p151
        $region58: #{tpu_custom_call.1} parent=39 // pred_check_branch
          %879 = sbr.rel (%p877) target = $region60
        $region59: #{tpu_custom_call.1} parent=39 // pred_region
          %s881 = ssub.s32 256, 256
          %882 = vsyncadd %s873, %s881
          %s883 = smul.addr %s23, 2
          %s884 = smul.addr %s883, 128
          %s885 = scalar_lea.hbm %s5, %s884
          %s886 = sshll.u32 %s876, 4
          %s887 = int_to_ptr.vmem [resolvable:$true] %s886
          %892 = dma.vmem_to_hbm [thread:$0]  %s887, 256, %s885, %s873, 128, 128, 8
        $region60: #{tpu_custom_call.1} parent=39 // pred_fallthru
          _
      $region40: #{tpu_custom_call.1} parent=5 // pred_fallthru
        _
      %p893 = scmp.le.s32.totalorder 2, %s18
      // Predicated region
      $region61: #{tpu_custom_call.1} parent=5 // pred_check
        %p894 = pneg %p893
      $region62: #{tpu_custom_call.1} parent=5 // pred_check_branch
        %896 = sbr.rel (%p894) target = $region64
      $region63: #{tpu_custom_call.1} parent=5 // pred_region
        %s897 = ssub.s32 %s18, 2
        // Predicated region
        $region65: #{tpu_custom_call.1} parent=63 // pred_check
          %p898 = pneg %p157
        $region66: #{tpu_custom_call.1} parent=63 // pred_check_branch
          %900 = sbr.rel (%p898) target = $region68
        $region67: #{tpu_custom_call.1} parent=63 // pred_region
          %s901 = sand.u32 %s142, 1
          %s902 = scalar_lea.sflag [#allocation6], %s901
          %s903 = sand.u32 %s142, 1
          %s904 = smul.addr %s903, 16
          %s905 = scalar_lea.vmem [#allocation10], %s904
          %906 = dma.done %s902, 256
        $region68: #{tpu_custom_call.1} parent=63 // pred_fallthru
          _
      $region64: #{tpu_custom_call.1} parent=5 // pred_fallthru
        _
    $region6: #{tpu_custom_call.1} parent=1 // loop_footer
      %s22 = sadd.s32 1, %s18
    $region7: #{tpu_custom_call.1} parent=1 // loop_footer_branch
      %17 = sbr.rel target = $region3
    $region8: #{tpu_custom_call.1} parent=1 // loop_exit
      _
    %907 = vsyncpa [#allocation5], 1
    %s908 = scalar_lea.sflag [#allocation5], 1
    %909 = vsyncpa %s908, 1
    %910 = vsyncpa [#allocation8], 1
    %911 = vsyncpa [#allocation6], 1
    %s912 = scalar_lea.sflag [#allocation6], 1
    %913 = vsyncpa %s912, 1

</llo_original>
